<compile_context>
chip_gen: v5e
topology: v5e:2x2
jax: 0.10.0
libtpu: 0.0.40
codegen_flags: <defaults>
</compile_context>

<pallas_src>
import jax
import jax.numpy as jnp
from jax.experimental import pallas as pl
from jax.experimental.pallas import tpu as pltpu


def _silu_kernel(x_ref, o_ref):
    x = x_ref[...]
    xf = x.astype(jnp.float32)
    o_ref[...] = (xf * jax.nn.sigmoid(xf)).astype(o_ref.dtype)


# ----------------------------------------------------------------------------
# Trace-time hardware queries (best effort; safe fallbacks everywhere).
# ----------------------------------------------------------------------------
def _tpu_info():
    try:
        return pltpu.get_tpu_info()
    except Exception:
        return None


def _vmem_capacity_bytes(info):
    if info is not None:
        for attr in ("vmem_capacity_bytes", "vmem_size_bytes", "vmem_bytes"):
            v = getattr(info, attr, None)
            if v:
                try:
                    v = int(v)
                except (TypeError, ValueError):
                    continue
                if v > 0:
                    return v
    # Conservative default (v7x per-TensorCore VMEM); safe on all generations.
    return 64 * 1024 * 1024


def _num_tensorcores(info):
    if info is not None:
        for attr in ("num_cores", "core_count", "num_tensorcores"):
            v = getattr(info, attr, None)
            if isinstance(v, int) and v > 0:
                return v
    try:
        kind = jax.devices()[0].device_kind.lower()
    except Exception:
        return 1
    # Multi-TensorCore-per-device parts.
    return 2 if any(t in kind for t in ("v4", "v5p", "v7")) else 1


def _pick_width(n):
    """Lane width for the 2-D view of the flattened tensor.

    Prefer the largest multiple-of-128 divisor of n (lane-dense, unmasked
    stores); otherwise the largest divisor <= 2048 so unaligned sizes need no
    pad/slice HBM round trip at all.
    """
    best_aligned = 0
    for w in range(128, 4096 + 1, 128):
        if n % w == 0:
            best_aligned = w
    if best_aligned:
        return best_aligned
    for w in range(min(n, 2048), 0, -1):
        if n % w == 0:
            return w
    return 1


def silu(x):
    """Elementwise SiLU via a tiled, lane-dense Pallas TPU kernel."""
    orig_shape = x.shape
    dtype = x.dtype
    n = x.size
    if n == 0:
        return x

    itemsize = jnp.dtype(dtype).itemsize
    flat = x.reshape(-1)

    width = _pick_width(n)
    pad = 0
    if width < 8:
        # Pathological sizes only (e.g. large primes): tiny-tail pad fallback.
        # TODO(synk): could avoid the full-tensor pad/slice copies here with a
        # manual-DMA tail block, but this path is essentially never hit.
        width = 128
        pad = (-n) % width
        flat = jnp.pad(flat, (0, pad))

    rows = (n + pad) // width
    x2 = flat.reshape(rows, width)

    # ---- generation-aware tiling -------------------------------------------
    info = _tpu_info()
    vmem_cap = _vmem_capacity_bytes(info)
    num_cores = _num_tensorcores(info)

    # Per-buffer tile budget; double-buffered in + out is ~4x this.  Keeps the
    # pipelined footprint around half of physical VMEM on every generation.
    tile_budget = min(max(vmem_cap // 8, 4 * 1024 * 1024), 16 * 1024 * 1024)

    # Sub-32-bit dtypes pack rows along sublanes: keep row tiles a multiple of
    # the packing granularity (8 f32, 16 bf16, 32 int8/fp8).
    sublane_mult = 8 * max(1, 4 // itemsize)

    row_tile = tile_budget // (width * itemsize)
    row_tile = max(sublane_mult, (row_tile // sublane_mult) * sublane_mult)

    if num_cores > 1 and rows > sublane_mult:
        # Give every TensorCore >= 2 grid steps so per-core double buffering
        # can overlap writeback of block i with the fetch of block i+1.
        target_steps = 2 * num_cores
        per_step = -(-rows // target_steps)
        per_step = -(-per_step // sublane_mult) * sublane_mult
        row_tile = min(row_tile, per_step)

    if row_tile >= rows:
        row_tile = rows  # full-extent block is always a legal block dim

    grid = (pl.cdiv(rows, row_tile),)

    tile_bytes = row_tile * width * itemsize
    vmem_limit = 4 * tile_bytes + 8 * 1024 * 1024      # pipelined bufs + margin
    vmem_limit = max(16 * 1024 * 1024, min(vmem_limit, (vmem_cap // 4) * 3))

    out = pl.pallas_call(
        _silu_kernel,
        out_shape=jax.ShapeDtypeStruct((rows, width), dtype),
        grid_spec=pltpu.PrefetchScalarGridSpec(
            num_scalar_prefetch=0,
            grid=grid,
            in_specs=[pl.BlockSpec((row_tile, width), lambda i: (i, 0))],
            out_specs=pl.BlockSpec((row_tile, width), lambda i: (i, 0)),
        ),
        compiler_params=pltpu.CompilerParams(
            dimension_semantics=("parallel",),
            vmem_limit_bytes=int(vmem_limit),
        ),
        cost_estimate=pl.CostEstimate(
            flops=3 * n,
            transcendentals=n,
            bytes_accessed=2 * n * itemsize,
        ),
    )(x2)

    out_flat = out.reshape(-1)
    if pad:
        out_flat = out_flat[:n]
    return out_flat.reshape(orig_shape)


if __name__ == "__main__":
    key = jax.random.PRNGKey(0)
    k0, k1, k2 = jax.random.split(key, 3)

    # Transformer-style activation shape: (batch, seq, hidden).
    x = jax.random.normal(k0, (2, 8, 32), dtype=jnp.float32)
    y = jax.block_until_ready(silu(x))
    y_ref = x * jax.nn.sigmoid(x)
    assert y.shape == x.shape and y.dtype == x.dtype
    assert jnp.allclose(y, y_ref, atol=1e-6, rtol=1e-6)

    # Unaligned shape exercises the no-pad ragged/divisor path.
    x2 = jax.random.normal(k1, (5, 37), dtype=jnp.float32)
    y2 = jax.block_until_ready(silu(x2))
    y2_ref = x2 * jax.nn.sigmoid(x2)
    assert y2.shape == x2.shape and y2.dtype == x2.dtype
    assert jnp.allclose(y2, y2_ref, atol=1e-6, rtol=1e-6)

    # bf16 exercises the packing-aware row tile and f32-compute/downcast path.
    x3 = jax.random.normal(k2, (2, 8, 32), dtype=jnp.bfloat16)
    y3 = jax.block_until_ready(silu(x3))
    y3_ref = (x3.astype(jnp.float32) * jax.nn.sigmoid(x3.astype(jnp.float32))
              ).astype(jnp.bfloat16)
    assert y3.shape == x3.shape and y3.dtype == x3.dtype
    assert jnp.allclose(y3.astype(jnp.float32), y3_ref.astype(jnp.float32),
                        atol=2e-2, rtol=2e-2)

    print("KERNEL_OK")
</pallas_src>

<mosaic_0001>
module attributes {stable_mosaic.version = 11 : i64} {
  func.func @_silu_kernel(%arg0: i32, %arg1: memref<1x512xf32, #tpu.memory_space<vmem>>, %arg2: memref<1x512xf32, #tpu.memory_space<vmem>>) attributes {dimension_semantics = [#tpu.dimension_semantics<parallel>], iteration_bounds = array<i64: 1>, scalar_prefetch = 0 : i64, scratch_operands = 0 : i64, tpu.core_type = #tpu.core_type<tc>, window_params = [{transform_indices = @transform_0, window_bounds = array<i64: 1, 512>}, {transform_indices = @transform_1, window_bounds = array<i64: 1, 512>}]} {
    %c0 = arith.constant 0 : index
    %c0_0 = arith.constant 0 : index
    %0 = vector.load %arg1[%c0, %c0_0] : memref<1x512xf32, #tpu.memory_space<vmem>>, vector<1x512xf32>
    %1 = arith.negf %0 : vector<1x512xf32>
    %2 = math.exp %1 : vector<1x512xf32>
    %cst = arith.constant 1.000000e+00 : f32
    %3 = vector.broadcast %cst : f32 to vector<1x512xf32>
    %4 = arith.addf %3, %2 : vector<1x512xf32>
    %5 = arith.divf %3, %4 : vector<1x512xf32>
    %6 = arith.mulf %0, %5 : vector<1x512xf32>
    %c0_1 = arith.constant 0 : index
    %c0_2 = arith.constant 0 : index
    %7 = vector.load %arg2[%c0_1, %c0_2] : memref<1x512xf32, #tpu.memory_space<vmem>>, vector<1x512xf32>
    tpu.vector_store %arg2[%c0_1, %c0_2], %6 {strides = array<i32>} : memref<1x512xf32, #tpu.memory_space<vmem>>, vector<1x512xf32>,
    return
  }
  func.func @transform_0(%arg0: i32) -> (i32, i32) {
    %c0_i32 = arith.constant 0 : i32
    %c0_i32_0 = arith.constant 0 : i32
    return %arg0, %c0_i32 : i32, i32
  }
  func.func @transform_1(%arg0: i32) -> (i32, i32) {
    %c0_i32 = arith.constant 0 : i32
    %c0_i32_0 = arith.constant 0 : i32
    return %arg0, %c0_i32 : i32, i32
  }
}

</mosaic_0001>

<llo_original>
// kernel: tpu_custom_call.1
$region0: #{tpu_custom_call.1}
  #allocation0 [shape = 'u32[]', space=smem, size = 0x4, offset = 0x4, fixed_abs, tag = 'smem constant byte address 0x4 - core index']
  #allocation1 [shape = 'u32[72,128]{1,0:T(1,128)}', space=vmem, size = 0x9000, scoped, tag = 'internal scratch']
  %s0 = inlined_call_operand.hbm [shape: f32[1,512], index: 0, kind: input, shape index: {}]
  %s1 = inlined_call_operand.hbm [shape: f32[1,512], index: 1, kind: output, shape index: {}]
  %s2 = sld [smem:[#allocation0]]
  $region18: #{tpu_custom_call.1} parent=0
    _
  %s4 = ssub.s32 1, %s2
  %s5 = scalar_select 0, %s4, %s2
  $region1: #{tpu_custom_call.1} parent=0
    #allocation2 [shape = 'u8[2048]{0}', space=vmem, size = 0x800, scoped, tag = 'input window, operand 0, single buffered']
    #allocation3 [shape = 's32[1]{0}', space=sflag, size = 0x4, scoped, tag = 'scoped memory for tpu_custom_call.1']
    #allocation4 [shape = 's32[1]{0}', space=sflag, size = 0x4, scoped, tag = 'scoped memory for tpu_custom_call.1']
    #allocation5 [shape = 'u8[2048]{0}', space=vmem, size = 0x800, scoped, tag = 'output window, operand 0, single buffered']
    %6 = vsyncpa [#allocation3], 0
    %7 = vsyncpa [#allocation4], 0
    // Predicated region
    $region2: #{tpu_custom_call.1} parent=1 // pred_check
      _
    $region3: #{tpu_custom_call.1} parent=1 // pred_check_branch
      %9 = sbr.rel (0) target = $region5
    $region4: #{tpu_custom_call.1} parent=1 // pred_region
      %11 = vsyncadd [#allocation3], 0
      %s13 = sshll.u32 %s0, 4
      %s14 = int_to_ptr.hbm [resolvable:$true] %s13
      %s15 = sshll.u32 [#allocation2], 4
      %s16 = int_to_ptr.vmem [resolvable:$true] %s15
      %18 = dma.hbm_to_vmem [thread:$0]  %s14, 64, %s16, [#allocation3]
    $region5: #{tpu_custom_call.1} parent=1 // pred_fallthru
      _
    // Predicated region
    $region6: #{tpu_custom_call.1} parent=1 // pred_check
      _
    $region7: #{tpu_custom_call.1} parent=1 // pred_check_branch
      %20 = sbr.rel (0) target = $region9
    $region8: #{tpu_custom_call.1} parent=1 // pred_region
      %22 = dma.done [#allocation3], 64
    $region9: #{tpu_custom_call.1} parent=1 // pred_fallthru
      _
    %v23 = vld [vmem:[#allocation2] sm:$0xf]
    %v24 = vxor.u32 %v23, 2147483648
    %v25 = vmul.f32 %v24, 1.442695
    %v26 = vpow.pop %v25
    %v27 = vadd.f32 %v26, 1.0
    %v28 = vrcp.pop %v27
    %v29 = vmul.f32 %v27, %v28
    %v30 = vsub.f32 1.0, %v29
    %v31 = vmul.f32 %v28, %v30
    %v32 = vadd.f32 %v28, %v31
    %vm33 = vweird.f32 %v27
    %vm34 = vweird.f32 %v28
    %vm35 = vmor %vm33, %vm34
    %v36 = vsel %vm35, %v28, %v32
    %v37 = vand.u32 2147483647, %v27
    %vm38 = vcmp.eq.f32.partialorder %v37, 8.507059e+37
    %v39 = vand.u32 %v27, 2147483648
    %v40 = vor.u32 1.1754944e-38, %v39
    %v41 = vsel %vm38, %v40, %v36
    %v42 = vmul.f32 1.0, %v41
    %v43 = vmul.f32 %v23, %v42
    %v44 = vlaneseq
    %vm45 = vcmp.ge.s32.totalorder %v44, 0
    %vm46 = vcmp.lt.s32.totalorder %v44, 512
    %vm47 = vmand %vm45, %vm46
    %48 = vst.msk [vmem:[#allocation5] sm:$0xf] %vm47, %v43
    // Predicated region
    $region10: #{tpu_custom_call.1} parent=1 // pred_check
      _
    $region11: #{tpu_custom_call.1} parent=1 // pred_check_branch
      %50 = sbr.rel (0) target = $region13
    $region12: #{tpu_custom_call.1} parent=1 // pred_region
      %52 = vsyncadd [#allocation4], 0
      %s54 = sshll.u32 [#allocation5], 4
      %s55 = int_to_ptr.vmem [resolvable:$true] %s54
      %s56 = sshll.u32 %s1, 4
      %s57 = int_to_ptr.hbm [resolvable:$true] %s56
      %59 = dma.vmem_to_hbm [thread:$0]  %s55, 64, %s57, [#allocation4]
    $region13: #{tpu_custom_call.1} parent=1 // pred_fallthru
      _
    // Predicated region
    $region14: #{tpu_custom_call.1} parent=1 // pred_check
      _
    $region15: #{tpu_custom_call.1} parent=1 // pred_check_branch
      %61 = sbr.rel (0) target = $region17
    $region16: #{tpu_custom_call.1} parent=1 // pred_region
      %63 = dma.done [#allocation4], 64
    $region17: #{tpu_custom_call.1} parent=1 // pred_fallthru
      _
    %64 = vsyncpa [#allocation3], 1
    %65 = vsyncpa [#allocation4], 1

</llo_original>
